<compile_context>
chip_gen: v6e
topology: v6e:2x2x1
jax: 0.10.0
libtpu: 0.0.40
codegen_flags: <defaults>
</compile_context>

<pallas_src>
import functools

import jax
import jax.numpy as jnp
from jax.experimental import pallas as pl
from jax.experimental.pallas import tpu as pltpu

N_FEATURES = 10               # 5 means + 5 stds
_PAD_VALUE = -1e9             # pad logit: exp underflows to 0 and d == 0 -> contributes 0
_GRIDLESS_MAX_BATCH = 32768   # whole-array-resident ceiling (fits default scoped VMEM
                              # on v5e/v6e/v7x with ample headroom)
_DEFAULT_BATCH_TILE = 8192    # lane-chunk size for the large-batch pipelined path


def _jsd_kernel_whole(p_ref, q_ref, o_ref):
    """Gridless path: whole (C, B) arrays resident in VMEM, scalar out in SMEM."""
    x = p_ref[...].astype(jnp.float32)
    y = q_ref[...].astype(jnp.float32)
    d = x - y
    # exp(shifted) is reused directly as the (unnormalized) softmax numerator:
    # 2*C*B transcendentals total, no logs.
    ep = jnp.exp(x - jnp.max(x, axis=-1, keepdims=True))
    eq = jnp.exp(y - jnp.max(y, axis=-1, keepdims=True))
    sp = jnp.sum(ep, axis=-1, keepdims=True)            # (C, 1) softmax denominators
    sq = jnp.sum(eq, axis=-1, keepdims=True)
    ap = jnp.sum(d * ep, axis=-1, keepdims=True)        # sum_b d * exp(x - max)
    aq = jnp.sum(d * eq, axis=-1, keepdims=True)
    per_col = ap / sp - aq / sq                         # = sum_b d * (P - Q), per column
    o_ref[0, 0] = 0.25 * jnp.sum(per_col)


def _jsd_kernel_tiled(p_ref, q_ref, o_ref,
                      mp_ref, sp_ref, ap_ref, mq_ref, sq_ref, aq_ref):
    """Large-batch path: grid over lane chunks with online-softmax accumulators."""
    step = pl.program_id(0)

    @pl.when(step == 0)
    def _init():
        mp_ref[...] = jnp.full_like(mp_ref, -jnp.inf)
        mq_ref[...] = jnp.full_like(mq_ref, -jnp.inf)
        sp_ref[...] = jnp.zeros_like(sp_ref)
        sq_ref[...] = jnp.zeros_like(sq_ref)
        ap_ref[...] = jnp.zeros_like(ap_ref)
        aq_ref[...] = jnp.zeros_like(aq_ref)

    x = p_ref[...].astype(jnp.float32)
    y = q_ref[...].astype(jnp.float32)
    d = x - y

    def _update(v, m_ref, s_ref, a_ref):
        m_old = m_ref[...]
        m_new = jnp.maximum(m_old, jnp.max(v, axis=-1, keepdims=True))
        alpha = jnp.exp(m_old - m_new)                   # rescale previous accumulators
        e = jnp.exp(v - m_new)
        s_ref[...] = alpha * s_ref[...] + jnp.sum(e, axis=-1, keepdims=True)
        a_ref[...] = alpha * a_ref[...] + jnp.sum(d * e, axis=-1, keepdims=True)
        m_ref[...] = m_new

    _update(x, mp_ref, sp_ref, ap_ref)
    _update(y, mq_ref, sq_ref, aq_ref)

    @pl.when(step == pl.num_programs(0) - 1)
    def _finalize():
        per_col = ap_ref[...] / sp_ref[...] - aq_ref[...] / sq_ref[...]   # (C, 1)
        o_ref[...] = 0.25 * jnp.sum(per_col, axis=0, keepdims=True)       # (1, 1)


@functools.partial(jax.jit, static_argnames=("batch_tile",))
def custom_loss_forward(y_pred, y_true, *, batch_tile=None):
    """y_pred, y_true: (batch, 10). Returns the scalar loss (float32)."""
    B, C = y_pred.shape

    # Lane-dense layout: the softmax/reduction axis (batch) sits on the 128-wide
    # lane axis; only the 10 feature rows live on sublanes.  No wrapper-side cast.
    p_t = jnp.transpose(y_pred)          # (C, B)
    q_t = jnp.transpose(y_true)
    itemsize = y_pred.dtype.itemsize

    use_tiled = (batch_tile is not None) or (B > _GRIDLESS_MAX_BATCH)

    if not use_tiled:
        cost = pl.CostEstimate(
            flops=10 * C * B,
            transcendentals=2 * C * B,
            bytes_accessed=2 * C * B * itemsize + 4,
        )
        out = pl.pallas_call(
            _jsd_kernel_whole,
            out_shape=jax.ShapeDtypeStruct((1, 1), jnp.float32),
            in_specs=[
                pl.BlockSpec(memory_space=pltpu.MemorySpace.VMEM),
                pl.BlockSpec(memory_space=pltpu.MemorySpace.VMEM),
            ],
            out_specs=pl.BlockSpec(memory_space=pltpu.MemorySpace.SMEM),
            cost_estimate=cost,
        )(p_t, q_t)
        return out[0, 0]

    # ---- batch-tiled, double-buffered pipeline for large B ----
    tb = _DEFAULT_BATCH_TILE if batch_tile is None else int(batch_tile)
    num_steps = pl.cdiv(B, tb)
    b_pad = num_steps * tb
    if b_pad != B:
        # Pad both inputs identically with a very negative logit: exp underflows to
        # exactly 0 and d == 0 there, so padded lanes contribute 0 to the loss.
        pad = ((0, 0), (0, b_pad - B))
        p_t = jnp.pad(p_t, pad, constant_values=_PAD_VALUE)
        q_t = jnp.pad(q_t, pad, constant_values=_PAD_VALUE)

    cost = pl.CostEstimate(
        flops=14 * C * b_pad,
        transcendentals=2 * C * b_pad + 4 * C * num_steps,
        bytes_accessed=2 * C * b_pad * itemsize + 4,
    )
    out = pl.pallas_call(
        _jsd_kernel_tiled,
        out_shape=jax.ShapeDtypeStruct((1, 1), jnp.float32),
        grid=(num_steps,),
        in_specs=[
            pl.BlockSpec((C, tb), lambda i: (0, i)),
            pl.BlockSpec((C, tb), lambda i: (0, i)),
        ],
        out_specs=pl.BlockSpec((1, 1), lambda i: (0, 0)),   # resident accumulator-style out
        scratch_shapes=[pltpu.VMEM((C, 1), jnp.float32) for _ in range(6)],
        compiler_params=pltpu.CompilerParams(
            dimension_semantics=("arbitrary",),              # reduction over batch chunks
        ),
        cost_estimate=cost,
    )(p_t, q_t)
    return out[0, 0]


def reference_loss(y_pred, y_true):
    """Plain-JAX reference matching the PyTorch custom_loss math literally."""
    lp = jax.nn.log_softmax(y_pred, axis=0)   # per-column softmax over the batch
    lq = jax.nn.log_softmax(y_true, axis=0)
    m = 0.5 * (lp + lq)
    kl_pm = jnp.sum(jnp.exp(lp) * (lp - m))
    kl_qm = jnp.sum(jnp.exp(lq) * (lq - m))
    return 0.5 * (kl_pm + kl_qm)


if __name__ == "__main__":
    key = jax.random.PRNGKey(0)
    kp1, kq1, kp2, kq2 = jax.random.split(key, 4)

    # Case 1: loss-sized input (batch=8) -> gridless whole-array kernel.
    b1 = 8
    y_pred1 = jax.random.normal(kp1, (b1, N_FEATURES), jnp.float32)
    y_true1 = jax.random.normal(kq1, (b1, N_FEATURES), jnp.float32)
    loss1 = jax.block_until_ready(custom_loss_forward(y_pred1, y_true1))
    ref1 = reference_loss(y_pred1, y_true1)
    assert loss1.shape == (), "loss must be a scalar"
    assert jnp.allclose(loss1, ref1, atol=1e-5, rtol=1e-4), (
        f"gridless mismatch vs reference: {loss1} vs {ref1}")

    # Case 2: exercise the batch-tiled online-softmax path (forced small tile),
    # including the -1e9 tail padding (300 is not a multiple of 128).
    b2 = 300
    y_pred2 = jax.random.normal(kp2, (b2, N_FEATURES), jnp.float32)
    y_true2 = jax.random.normal(kq2, (b2, N_FEATURES), jnp.float32)
    loss2 = jax.block_until_ready(
        custom_loss_forward(y_pred2, y_true2, batch_tile=128))
    ref2 = reference_loss(y_pred2, y_true2)
    assert loss2.shape == (), "loss must be a scalar"
    assert jnp.allclose(loss2, ref2, atol=1e-5, rtol=1e-4), (
        f"tiled mismatch vs reference: {loss2} vs {ref2}")

    print("KERNEL_OK")
</pallas_src>

<mosaic_0001>
module attributes {stable_mosaic.version = 11 : i64} {
  func.func @_jsd_kernel_whole(%arg0: memref<10x8xf32, #tpu.memory_space<vmem>>, %arg1: memref<10x8xf32, #tpu.memory_space<vmem>>, %arg2: memref<1x1xf32, #tpu.memory_space<smem>>) attributes {dimension_semantics = [], scalar_prefetch = 0 : i64, scratch_operands = 0 : i64, tpu.core_type = #tpu.core_type<tc>} {
    %c0 = arith.constant 0 : index
    %c0_0 = arith.constant 0 : index
    %0 = vector.load %arg0[%c0, %c0_0] : memref<10x8xf32, #tpu.memory_space<vmem>>, vector<10x8xf32>
    %c0_1 = arith.constant 0 : index
    %c0_2 = arith.constant 0 : index
    %1 = vector.load %arg1[%c0_1, %c0_2] : memref<10x8xf32, #tpu.memory_space<vmem>>, vector<10x8xf32>
    %2 = arith.subf %0, %1 : vector<10x8xf32>
    %cst = arith.constant dense<0xFF800000> : vector<10xf32>
    %3 = vector.multi_reduction <maximumf>, %0, %cst [1] : vector<10x8xf32> to vector<10xf32>
    %4 = vector.shape_cast %3 : vector<10xf32> to vector<10x1xf32>
    %5 = vector.broadcast %4 : vector<10x1xf32> to vector<10x8xf32>
    %6 = arith.subf %0, %5 : vector<10x8xf32>
    %7 = math.exp %6 : vector<10x8xf32>
    %cst_3 = arith.constant dense<0xFF800000> : vector<10xf32>
    %8 = vector.multi_reduction <maximumf>, %1, %cst_3 [1] : vector<10x8xf32> to vector<10xf32>
    %9 = vector.shape_cast %8 : vector<10xf32> to vector<10x1xf32>
    %10 = vector.broadcast %9 : vector<10x1xf32> to vector<10x8xf32>
    %11 = arith.subf %1, %10 : vector<10x8xf32>
    %12 = math.exp %11 : vector<10x8xf32>
    %cst_4 = arith.constant dense<0.000000e+00> : vector<10xf32>
    %13 = vector.multi_reduction <add>, %7, %cst_4 [1] : vector<10x8xf32> to vector<10xf32>
    %14 = vector.shape_cast %13 : vector<10xf32> to vector<10x1xf32>
    %cst_5 = arith.constant dense<0.000000e+00> : vector<10xf32>
    %15 = vector.multi_reduction <add>, %12, %cst_5 [1] : vector<10x8xf32> to vector<10xf32>
    %16 = vector.shape_cast %15 : vector<10xf32> to vector<10x1xf32>
    %17 = arith.mulf %2, %7 : vector<10x8xf32>
    %cst_6 = arith.constant dense<0.000000e+00> : vector<10xf32>
    %18 = vector.multi_reduction <add>, %17, %cst_6 [1] : vector<10x8xf32> to vector<10xf32>
    %19 = vector.shape_cast %18 : vector<10xf32> to vector<10x1xf32>
    %20 = arith.mulf %2, %12 : vector<10x8xf32>
    %cst_7 = arith.constant dense<0.000000e+00> : vector<10xf32>
    %21 = vector.multi_reduction <add>, %20, %cst_7 [1] : vector<10x8xf32> to vector<10xf32>
    %22 = vector.shape_cast %21 : vector<10xf32> to vector<10x1xf32>
    %23 = arith.divf %19, %14 : vector<10x1xf32>
    %24 = arith.divf %22, %16 : vector<10x1xf32>
    %25 = arith.subf %23, %24 : vector<10x1xf32>
    %26 = vector.shape_cast %25 : vector<10x1xf32> to vector<1x10x1xf32>
    %cst_8 = arith.constant dense<0.000000e+00> : vector<1xf32>
    %27 = vector.multi_reduction <add>, %26, %cst_8 [1, 2] : vector<1x10x1xf32> to vector<1xf32>
    %28 = vector.shape_cast %27 : vector<1xf32> to vector<1x1x1xf32>
    %29 = vector.extract %28[0, 0, 0] : f32 from vector<1x1x1xf32>
    %cst_9 = arith.constant 2.500000e-01 : f32
    %30 = arith.mulf %cst_9, %29 : f32
    %c0_10 = arith.constant 0 : index
    %c0_11 = arith.constant 0 : index
    %31 = memref.load %arg2[%c0_10, %c0_11] : memref<1x1xf32, #tpu.memory_space<smem>>
    memref.store %30, %arg2[%c0_10, %c0_11] : memref<1x1xf32, #tpu.memory_space<smem>>
    return
  }
}

</mosaic_0001>

<llo_original>
// kernel: custom_loss_forward.1
$region0: #{custom_loss_forward.1}
  #allocation0 [shape = 'u32[]', space=smem, size = 0x4, offset = 0x4, fixed_abs, tag = 'smem constant byte address 0x4 - core index']
  #allocation1 [shape = 'u32[144,128]{1,0:T(1,128)}', space=vmem, size = 0x12000, scoped, tag = 'internal scratch']
  %s0 = inlined_call_operand.vmem [shape: f32[10,8], index: 0, kind: input, shape index: {}]
  %s1 = inlined_call_operand.vmem [shape: f32[10,8], index: 1, kind: input, shape index: {}]
  %s2 = inlined_call_operand.hbm [shape: f32[1,1], index: 2, kind: output, shape index: {}]
  %s3 = sld [smem:[#allocation0]]
  $region18: #{custom_loss_forward.1} parent=0
    _
  %s5 = ssub.s32 1, %s3
  %s6 = scalar_select 0, %s5, %s3
  $region1: #{custom_loss_forward.1} parent=0
    #allocation2 [shape = 'u8[512]{0}', space=smem, size = 0x200, scoped, tag = 'output window, operand 0, single buffered']
    #allocation3 [shape = 's32[1]{0}', space=sflag, size = 0x4, scoped, tag = 'scoped memory for custom_loss_forward.1']
    %7 = vsyncpa [#allocation3], 0
    // Predicated region
    $region2: #{custom_loss_forward.1} parent=1 // pred_check
      _
    $region3: #{custom_loss_forward.1} parent=1 // pred_check_branch
      %9 = sbr.rel (0) target = $region5
    $region4: #{custom_loss_forward.1} parent=1 // pred_region
      _
    $region5: #{custom_loss_forward.1} parent=1 // pred_fallthru
      _
    // Predicated region
    $region6: #{custom_loss_forward.1} parent=1 // pred_check
      _
    $region7: #{custom_loss_forward.1} parent=1 // pred_check_branch
      %11 = sbr.rel (0) target = $region9
    $region8: #{custom_loss_forward.1} parent=1 // pred_region
      _
    $region9: #{custom_loss_forward.1} parent=1 // pred_fallthru
      _
    %v12 = vld [vmem:[%s0] sm:$0xff]
    %v13 = vld [vmem:[%s0 + $0x8] sm:$0x3]
    %v14 = vld [vmem:[%s1] sm:$0xff]
    %v15 = vld [vmem:[%s1 + $0x8] sm:$0x3]
    %v16 = vsub.f32 %v12, %v14
    %v17 = vsub.f32 %v13, %v15
    %vm18 = vcmask 64512
    %v19 = vsel %vm18, %v12, -inf
    %20 = vmax.xlane.f32.xlu0 %v19
    %v21 = vpop.xlane.xlu0 %20
    %vm22 = vcmask 58368
    %v23 = vsel %vm22, %v13, -inf
    %24 = vmax.xlane.f32.xlu0 %v23
    %v25 = vpop.xlane.xlu0 %24
    %v26 = vsub.f32 %v12, %v21
    %v27 = vsub.f32 %v13, %v25
    %v28 = vmul.f32 %v26, 1.442695
    %v29 = vpow.pop %v28
    %v30 = vmul.f32 %v27, 1.442695
    %v31 = vpow.pop %v30
    %v32 = vsel %vm18, %v14, -inf
    %33 = vmax.xlane.f32.xlu0 %v32
    %v34 = vpop.xlane.xlu0 %33
    %v35 = vsel %vm22, %v15, -inf
    %36 = vmax.xlane.f32.xlu0 %v35
    %v37 = vpop.xlane.xlu0 %36
    %v38 = vsub.f32 %v14, %v34
    %v39 = vsub.f32 %v15, %v37
    %v40 = vmul.f32 %v38, 1.442695
    %v41 = vpow.pop %v40
    %v42 = vmul.f32 %v39, 1.442695
    %v43 = vpow.pop %v42
    %v44 = vsel %vm18, %v29, 0.0
    %45 = vadd.xlane.f32.xlu0 %v44
    %v46 = vpop.xlane.xlu0 %45
    %v47 = vsel %vm22, %v31, 0.0
    %48 = vadd.xlane.f32.xlu0 %v47
    %v49 = vpop.xlane.xlu0 %48
    %v50 = vsel %vm18, %v41, 0.0
    %51 = vadd.xlane.f32.xlu0 %v50
    %v52 = vpop.xlane.xlu0 %51
    %v53 = vsel %vm22, %v43, 0.0
    %54 = vadd.xlane.f32.xlu0 %v53
    %v55 = vpop.xlane.xlu0 %54
    %v56 = vmul.f32 %v16, %v29
    %v57 = vmul.f32 %v17, %v31
    %v58 = vsel %vm18, %v56, 0.0
    %59 = vadd.xlane.f32.xlu0 %v58
    %v60 = vpop.xlane.xlu0 %59
    %v61 = vsel %vm22, %v57, 0.0
    %62 = vadd.xlane.f32.xlu0 %v61
    %v63 = vpop.xlane.xlu0 %62
    %v64 = vmul.f32 %v16, %v41
    %v65 = vmul.f32 %v17, %v43
    %v66 = vsel %vm18, %v64, 0.0
    %67 = vadd.xlane.f32.xlu0 %v66
    %v68 = vpop.xlane.xlu0 %67
    %v69 = vsel %vm22, %v65, 0.0
    %70 = vadd.xlane.f32.xlu0 %v69
    %v71 = vpop.xlane.xlu0 %70
    %v72 = vrcp.pop %v46
    %v73 = vmul.f32 %v60, %v72
    %v74 = vrcp.pop %v49
    %v75 = vmul.f32 %v63, %v74
    %v76 = vrcp.pop %v52
    %v77 = vmul.f32 %v68, %v76
    %v78 = vrcp.pop %v55
    %v79 = vmul.f32 %v71, %v78
    %v80 = vsub.f32 %v73, %v77
    %v81 = vsub.f32 %v75, %v79
    %vm82 = vcmask 7168
    %v83 = vsel %vm82, %v80, 0.0
    %vm84 = vcmask 1024
    %v85 = vsel %vm84, %v81, 0.0
    %v86 = vadd.f32 %v83, %v85
    %87 = vadd.xlane.f32.xlu0 %v86
    %v88 = vpop.xlane.xlu0 %87
    %v89 = vrot.slane %v88, 4
    %v90 = vadd.f32 %v88, %v89
    %v91 = vrot.slane %v90, 2
    %v92 = vadd.f32 %v90, %v91
    %v93 = vrot.slane %v92, 1
    %v94 = vadd.f32 %v92, %v93
    %s95 = vtos %v94
    %s96 = smul.f32 %s95, 0.25
    %s97 = scalar_lea.smem [#allocation2], 0
    %98 = sst [smem:[%s97]] %s96
    // Predicated region
    $region10: #{custom_loss_forward.1} parent=1 // pred_check
      _
    $region11: #{custom_loss_forward.1} parent=1 // pred_check_branch
      %100 = sbr.rel (0) target = $region13
    $region12: #{custom_loss_forward.1} parent=1 // pred_region
      %s102 = ssub.s32 16, 16
      %103 = vsyncadd [#allocation3], %s102
      %106 = dma.smem_to_hbm [#allocation2], 16, %s2, [#allocation3]
    $region13: #{custom_loss_forward.1} parent=1 // pred_fallthru
      _
    // Predicated region
    $region14: #{custom_loss_forward.1} parent=1 // pred_check
      _
    $region15: #{custom_loss_forward.1} parent=1 // pred_check_branch
      %108 = sbr.rel (0) target = $region17
    $region16: #{custom_loss_forward.1} parent=1 // pred_region
      %109 = dma.done [#allocation3], 16
    $region17: #{custom_loss_forward.1} parent=1 // pred_fallthru
      _
    %110 = sfence
    %111 = vsyncpa [#allocation3], 1

</llo_original>
